<compile_context>
chip_gen: v7x
topology: tpu7x:2x2x1
jax: 0.10.0
libtpu: 0.0.40
codegen_flags: <defaults>
</compile_context>

<pallas_src>
import functools

import jax
import jax.numpy as jnp
from jax.experimental import pallas as pl
from jax.experimental.pallas import tpu as pltpu

N_CLASSES = 10
SIZE_HIDDEN = 100
SIZE_INPUT = 784

HIDDEN_PAD = 128          # lane-aligned hidden width (zero-padded from 100)
DEFAULT_TILE_B = 4096     # batch rows per grid step (multiple of 16)


def _round_up(n, m):
    return ((n + m - 1) // m) * m


def _mlp_kernel(x_ref, w1_ref, b1_ref, w2_ref, b2_ref, o_ref):
    # x tile arrives in its HBM dtype (f32 or bf16); cast to bf16 here (VPU
    # work hidden under the x DMA) instead of a separate XLA pass over HBM.
    x = x_ref[...].astype(jnp.bfloat16)
    h = jnp.dot(x, w1_ref[...], preferred_element_type=jnp.float32)    # (TILE_B, 128) f32
    h = jnp.maximum(h + b1_ref[...], 0.0)                              # bias + ReLU in f32
    h = h.astype(jnp.bfloat16)                                         # bf16 into second matmul
    o = jnp.dot(h, w2_ref[...], preferred_element_type=jnp.float32)    # (TILE_B, 10) f32
    o_ref[...] = (o + b2_ref[...]).astype(o_ref.dtype)


def prepare_params(w1, b1, w2, b2):
    """PyTorch-layout params -> kernel layout (done once, not per call).

    w1: (100, 784), b1: (100,), w2: (10, 100), b2: (10,)
    Returns (w1_t_pad bf16 (784,128), b1_pad f32 (1,128),
             w2_t_pad bf16 (128,10),  b2 f32 (1,10)).
    Padded hidden units see bias 0 -> relu(0) = 0, and their w2 rows are 0,
    so they contribute nothing (exactly preserves the original forward).
    """
    w1_t = jnp.zeros((SIZE_INPUT, HIDDEN_PAD), jnp.float32).at[:, :SIZE_HIDDEN].set(w1.T)
    b1_p = jnp.zeros((1, HIDDEN_PAD), jnp.float32).at[:, :SIZE_HIDDEN].set(b1)
    w2_t = jnp.zeros((HIDDEN_PAD, N_CLASSES), jnp.float32).at[:SIZE_HIDDEN, :].set(w2.T)
    b2_p = b2.reshape(1, N_CLASSES).astype(jnp.float32)
    return w1_t.astype(jnp.bfloat16), b1_p, w2_t.astype(jnp.bfloat16), b2_p


@functools.partial(jax.jit, static_argnames=("tile_b",))
def neural_net_forward(x, w1_t, b1, w2_t, b2, *, tile_b=DEFAULT_TILE_B):
    """x: (B, 784) in f32 or bf16 (streamed as-is, no wrapper copy);
    params as produced by prepare_params."""
    B = x.shape[0]

    # Tile choice: multiple of 16, never larger than needed, and <= ceil(B/2)
    # so there are >= 2 grid steps (megacore sharding on v7x) once B allows it.
    tile_b = min(tile_b, max(16, _round_up(pl.cdiv(B, 2), 16)))
    grid = (pl.cdiv(B, tile_b),)   # ragged last tile handled by Pallas clipping

    x_bytes = x.dtype.itemsize
    flops = 2 * B * SIZE_INPUT * HIDDEN_PAD + 2 * B * HIDDEN_PAD * N_CLASSES
    bytes_accessed = (
        B * SIZE_INPUT * x_bytes                     # x stream (bound resource)
        + SIZE_INPUT * HIDDEN_PAD * 2                # w1 (bf16)
        + HIDDEN_PAD * N_CLASSES * 2                 # w2 (bf16)
        + (HIDDEN_PAD + N_CLASSES) * 4               # biases (f32)
        + B * N_CLASSES * 4                          # output (f32)
    )

    out = pl.pallas_call(
        _mlp_kernel,
        out_shape=jax.ShapeDtypeStruct((B, N_CLASSES), jnp.float32),
        grid=grid,
        in_specs=[
            pl.BlockSpec((tile_b, SIZE_INPUT), lambda i: (i, 0)),      # streamed x tiles
            pl.BlockSpec((SIZE_INPUT, HIDDEN_PAD), lambda i: (0, 0)),  # resident weights
            pl.BlockSpec((1, HIDDEN_PAD), lambda i: (0, 0)),
            pl.BlockSpec((HIDDEN_PAD, N_CLASSES), lambda i: (0, 0)),
            pl.BlockSpec((1, N_CLASSES), lambda i: (0, 0)),
        ],
        out_specs=pl.BlockSpec((tile_b, N_CLASSES), lambda i: (i, 0)),
        compiler_params=pltpu.CompilerParams(
            dimension_semantics=("parallel",),
            vmem_limit_bytes=48 * 1024 * 1024,
        ),
        cost_estimate=pl.CostEstimate(
            flops=flops, transcendentals=0, bytes_accessed=bytes_accessed),
    )(x, w1_t, b1, w2_t, b2)

    return out


def _init_params(key):
    # Deterministic synthetic init mirroring nn.Linear shapes:
    #   lin_1.weight: (100, 784), lin_1.bias: (100,)
    #   lin_2.weight: (10, 100),  lin_2.bias: (10,)
    k1, k2, k3, k4 = jax.random.split(key, 4)
    bound1 = 1.0 / (SIZE_INPUT ** 0.5)
    bound2 = 1.0 / (SIZE_HIDDEN ** 0.5)
    w1 = jax.random.uniform(k1, (SIZE_HIDDEN, SIZE_INPUT), jnp.float32, -bound1, bound1)
    b1 = jax.random.uniform(k2, (SIZE_HIDDEN,), jnp.float32, -bound1, bound1)
    w2 = jax.random.uniform(k3, (N_CLASSES, SIZE_HIDDEN), jnp.float32, -bound2, bound2)
    b2 = jax.random.uniform(k4, (N_CLASSES,), jnp.float32, -bound2, bound2)
    return w1, b1, w2, b2


if __name__ == "__main__":
    key = jax.random.PRNGKey(0)
    k_x, k_p = jax.random.split(key)

    w1, b1, w2, b2 = _init_params(k_p)
    w1_t, b1_p, w2_t, b2_p = prepare_params(w1, b1, w2, b2)

    # batch=32: exact tiling.  batch=37: ragged last tile (clipped partial block).
    for batch in (32, 37):
        x = jax.random.normal(jax.random.fold_in(k_x, batch),
                              (batch, SIZE_INPUT), jnp.float32)

        out = jax.block_until_ready(neural_net_forward(x, w1_t, b1_p, w2_t, b2_p))
        assert out.shape == (batch, N_CLASSES)

        # Reference 1: exact PyTorch-style f32 forward (loose tolerance: kernel
        # uses bf16 operands with f32 accumulation).
        ref_f32 = jnp.maximum(x @ w1.T + b1, 0.0) @ w2.T + b2
        assert jnp.allclose(out, ref_f32, atol=3e-2, rtol=3e-2), (
            float(jnp.max(jnp.abs(out - ref_f32))))

        # Reference 2: same bf16 quantization applied in pure JAX (tight tol).
        xb = x.astype(jnp.bfloat16).astype(jnp.float32)
        h_ref = jnp.maximum(xb @ w1_t.astype(jnp.float32) + b1_p, 0.0)
        h_ref = h_ref.astype(jnp.bfloat16).astype(jnp.float32)
        ref_bf16 = h_ref @ w2_t.astype(jnp.float32) + b2_p
        assert jnp.allclose(out, ref_bf16, atol=2e-3, rtol=2e-3), (
            float(jnp.max(jnp.abs(out - ref_bf16))))

        # bf16-input fast path (2 B/elem on the bound x stream) gives the same result.
        out_bf16_in = jax.block_until_ready(
            neural_net_forward(x.astype(jnp.bfloat16), w1_t, b1_p, w2_t, b2_p))
        assert jnp.allclose(out_bf16_in, ref_bf16, atol=2e-3, rtol=2e-3), (
            float(jnp.max(jnp.abs(out_bf16_in - ref_bf16))))

    print("KERNEL_OK")
</pallas_src>

<mosaic_0001>
module attributes {stable_mosaic.version = 11 : i64} {
  func.func @_mlp_kernel(%arg0: i32, %arg1: memref<16x784xf32, #tpu.memory_space<vmem>>, %arg2: memref<784x128xbf16, #tpu.memory_space<vmem>>, %arg3: memref<1x128xf32, #tpu.memory_space<vmem>>, %arg4: memref<128x10xbf16, #tpu.memory_space<vmem>>, %arg5: memref<1x10xf32, #tpu.memory_space<vmem>>, %arg6: memref<16x10xf32, #tpu.memory_space<vmem>>) attributes {dimension_semantics = [#tpu.dimension_semantics<parallel>], iteration_bounds = array<i64: 2>, scalar_prefetch = 0 : i64, scratch_operands = 0 : i64, tpu.core_type = #tpu.core_type<tc>, window_params = [{transform_indices = @transform_0, window_bounds = array<i64: 16, 784>}, {pipeline_mode = #tpu.pipeline_mode<synchronous>, transform_indices = @transform_1, window_bounds = array<i64: 784, 128>}, {pipeline_mode = #tpu.pipeline_mode<synchronous>, transform_indices = @transform_2, window_bounds = array<i64: 1, 128>}, {pipeline_mode = #tpu.pipeline_mode<synchronous>, transform_indices = @transform_3, window_bounds = array<i64: 128, 10>}, {pipeline_mode = #tpu.pipeline_mode<synchronous>, transform_indices = @transform_4, window_bounds = array<i64: 1, 10>}, {transform_indices = @transform_5, window_bounds = array<i64: 16, 10>}]} {
    %c0 = arith.constant 0 : index
    %c0_0 = arith.constant 0 : index
    %0 = vector.load %arg1[%c0, %c0_0] : memref<16x784xf32, #tpu.memory_space<vmem>>, vector<16x784xf32>
    %1 = arith.truncf %0 : vector<16x784xf32> to vector<16x784xbf16>
    %c0_1 = arith.constant 0 : index
    %c0_2 = arith.constant 0 : index
    %2 = vector.load %arg2[%c0_1, %c0_2] : memref<784x128xbf16, #tpu.memory_space<vmem>>, vector<784x128xbf16>
    %cst = arith.constant dense<0.000000e+00> : vector<16x128xf32>
    %3 = tpu.matmul %1, %2, %cst {dimension_numbers = #tpu.dot_dimension_numbers<[1], [0], [0], [1], [0, 0, 1, 1], [], []>} : vector<16x784xbf16>, vector<784x128xbf16>, vector<16x128xf32> -> vector<16x128xf32>
    %c0_3 = arith.constant 0 : index
    %c0_4 = arith.constant 0 : index
    %4 = vector.load %arg3[%c0_3, %c0_4] : memref<1x128xf32, #tpu.memory_space<vmem>>, vector<1x128xf32>
    %5 = vector.broadcast %4 : vector<1x128xf32> to vector<16x128xf32>
    %6 = arith.addf %3, %5 : vector<16x128xf32>
    %cst_5 = arith.constant 0.000000e+00 : f32
    %7 = vector.broadcast %cst_5 : f32 to vector<16x128xf32>
    %8 = arith.maximumf %6, %7 : vector<16x128xf32>
    %9 = arith.truncf %8 : vector<16x128xf32> to vector<16x128xbf16>
    %c0_6 = arith.constant 0 : index
    %c0_7 = arith.constant 0 : index
    %10 = vector.load %arg4[%c0_6, %c0_7] : memref<128x10xbf16, #tpu.memory_space<vmem>>, vector<128x10xbf16>
    %cst_8 = arith.constant dense<0.000000e+00> : vector<16x10xf32>
    %11 = tpu.matmul %9, %10, %cst_8 {dimension_numbers = #tpu.dot_dimension_numbers<[1], [0], [0], [1], [0, 0, 1, 1], [], []>} : vector<16x128xbf16>, vector<128x10xbf16>, vector<16x10xf32> -> vector<16x10xf32>
    %c0_9 = arith.constant 0 : index
    %c0_10 = arith.constant 0 : index
    %12 = vector.load %arg5[%c0_9, %c0_10] : memref<1x10xf32, #tpu.memory_space<vmem>>, vector<1x10xf32>
    %13 = vector.broadcast %12 : vector<1x10xf32> to vector<16x10xf32>
    %14 = arith.addf %11, %13 : vector<16x10xf32>
    %c0_11 = arith.constant 0 : index
    %c0_12 = arith.constant 0 : index
    %15 = vector.load %arg6[%c0_11, %c0_12] : memref<16x10xf32, #tpu.memory_space<vmem>>, vector<16x10xf32>
    tpu.vector_store %arg6[%c0_11, %c0_12], %14 {strides = array<i32>} : memref<16x10xf32, #tpu.memory_space<vmem>>, vector<16x10xf32>,
    return
  }
  func.func @transform_0(%arg0: i32) -> (i32, i32) {
    %c0_i32 = arith.constant 0 : i32
    %c0_i32_0 = arith.constant 0 : i32
    return %arg0, %c0_i32 : i32, i32
  }
  func.func @transform_1(%arg0: i32) -> (i32, i32) {
    %c0_i32 = arith.constant 0 : i32
    %c0_i32_0 = arith.constant 0 : i32
    %c0_i32_1 = arith.constant 0 : i32
    return %c0_i32, %c0_i32_0 : i32, i32
  }
  func.func @transform_2(%arg0: i32) -> (i32, i32) {
    %c0_i32 = arith.constant 0 : i32
    %c0_i32_0 = arith.constant 0 : i32
    %c0_i32_1 = arith.constant 0 : i32
    return %c0_i32, %c0_i32_0 : i32, i32
  }
  func.func @transform_3(%arg0: i32) -> (i32, i32) {
    %c0_i32 = arith.constant 0 : i32
    %c0_i32_0 = arith.constant 0 : i32
    %c0_i32_1 = arith.constant 0 : i32
    return %c0_i32, %c0_i32_0 : i32, i32
  }
  func.func @transform_4(%arg0: i32) -> (i32, i32) {
    %c0_i32 = arith.constant 0 : i32
    %c0_i32_0 = arith.constant 0 : i32
    %c0_i32_1 = arith.constant 0 : i32
    return %c0_i32, %c0_i32_0 : i32, i32
  }
  func.func @transform_5(%arg0: i32) -> (i32, i32) {
    %c0_i32 = arith.constant 0 : i32
    %c0_i32_0 = arith.constant 0 : i32
    return %arg0, %c0_i32 : i32, i32
  }
}

</mosaic_0001>

<llo_original>
// kernel: neural_net_forward.1
$region0: #{neural_net_forward.1}
  #allocation0 [shape = 'u32[]', space=smem, size = 0x4, offset = 0x4, fixed_abs, tag = 'smem constant byte address 0x4 - core index']
  #allocation1 [shape = 'u32[144,128]{1,0:T(1,128)}', space=vmem, size = 0x12000, scoped, tag = 'internal scratch']
  %s0 = inlined_call_operand.hbm [shape: f32[32,784], index: 0, kind: input, shape index: {}]
  %s1 = inlined_call_operand.hbm [shape: bf16[784,128], index: 1, kind: input, shape index: {}]
  %s2 = inlined_call_operand.vmem [shape: f32[1,128], index: 2, kind: input, shape index: {}]
  %s3 = inlined_call_operand.vmem [shape: bf16[128,10], index: 3, kind: input, shape index: {}]
  %s4 = inlined_call_operand.vmem [shape: f32[1,10], index: 4, kind: input, shape index: {}]
  %s5 = inlined_call_operand.vmem [shape: f32[32,10], index: 5, kind: output, shape index: {}]
  %s6 = sld [smem:[#allocation0]]
  $region61: #{neural_net_forward.1} parent=0
    _
  %s8 = ssub.s32 1, %s6
  %s9 = scalar_select 0, %s8, %s6
  $region1: #{neural_net_forward.1} parent=0
    #allocation2 [shape = 'u8[114688]{0}', space=vmem, size = 0x1c000, scoped, tag = 'input window, operand 0']
    #allocation3 [shape = 's32[2]{0}', space=sflag, size = 0x8, scoped, tag = 'scoped memory for neural_net_forward.1']
    #allocation4 [shape = 'u8[200704]{0}', space=vmem, size = 0x31000, scoped, tag = 'input window, operand 1, single buffered']
    #allocation5 [shape = 's32[1]{0}', space=sflag, size = 0x4, scoped, tag = 'scoped memory for neural_net_forward.1']
    %10 = vsyncpa [#allocation3], 0
    %s11 = scalar_lea.sflag [#allocation3], 1
    %12 = vsyncpa %s11, 0
    %13 = vsyncpa [#allocation5], 0
    loop: start=0, step=1, limit=4
    $region2: #{neural_net_forward.1} parent=1 // loop_pre_header
      _
    $region3: #{neural_net_forward.1} parent=1 // loop_header
      %s15 = sphi 0, %s19
      %p16 = scmp.ge.s32.totalorder %s15, 4
      %s25 = sphi 0, %s27
      %s28 = sphi 0, %s25
      %s29 = sphi 0, %s28
      %s45 = sphi 0, %s29
      %s49 = sphi 0, %s49
      %s51 = sphi 0, %s49
      %s52 = sphi 0, %s51
      %s66 = sphi 0, %s52
      %s70 = sphi 0, %s70
      %s72 = sphi 0, %s70
      %s73 = sphi 0, %s72
      %s87 = sphi 0, %s73
      %s91 = sphi 0, %s91
      %s93 = sphi 0, %s91
      %s94 = sphi 0, %s93
      %s108 = sphi 0, %s94
      %s112 = sphi 0, %s112
      %s114 = sphi 0, %s112
      %s115 = sphi 0, %s114
      %s129 = sphi 0, %s115
      %s135 = sphi 0, %s137
      %s138 = sphi 0, %s135
      %s139 = sphi 0, %s138
      %s155 = sphi 0, %s139
    $region4: #{neural_net_forward.1} parent=1 // loop_header_branch
      %18 = sbr.rel (%p16) target = $region8
    $region5: #{neural_net_forward.1} parent=1 // loop_body
      %s20 = ssub.s32 %s15, 1
      %s21 = ssub.s32 %s15, 2
      %s22 = sadd.s32 %s15, 1
      %s23 = ssub.s32 %s15, %s22
      %p24 = scmp.eq.s32.totalorder %s23, 0
      %s26 = sadd.s32 %s25, 1
      %s27 = scalar_select %p24, %s25, %s26
      %p30 = pneg %p24
      %p31 = scmp.eq.s32.totalorder %s15, 1
      %p32 = por %p30, %p31
      %p33 = scmp.ne.s32.totalorder %s25, %s28
      %p34 = scmp.eq.s32.totalorder %s15, 0
      %p35 = por %p33, %p34
      %p36 = scmp.ne.s32.totalorder %s25, %s28
      %p37 = scmp.eq.s32.totalorder %s20, 1
      %p38 = por %p36, %p37
      %p39 = scmp.ne.s32.totalorder %s28, %s29
      %p40 = scmp.eq.s32.totalorder %s20, 0
      %p41 = por %p39, %p40
      %p42 = scmp.ne.s32.totalorder %s28, %s29
      %p43 = scmp.eq.s32.totalorder %s21, 1
      %p44 = por %p42, %p43
      %p46 = scmp.ne.s32.totalorder %s29, %s45
      %p47 = scmp.eq.s32.totalorder %s21, 0
      %p48 = por %p46, %p47
      %s50 = sadd.s32 %s49, 1
      %p53 = scmp.eq.s32.totalorder %s15, 1
      %p54 = scmp.ne.s32.totalorder %s49, %s51
      %p55 = scmp.eq.s32.totalorder %s15, 0
      %p56 = por %p54, %p55
      %p57 = scmp.ne.s32.totalorder %s49, %s51
      %p58 = scmp.eq.s32.totalorder %s20, 1
      %p59 = por %p57, %p58
      %p60 = scmp.ne.s32.totalorder %s51, %s52
      %p61 = scmp.eq.s32.totalorder %s20, 0
      %p62 = por %p60, %p61
      %p63 = scmp.ne.s32.totalorder %s51, %s52
      %p64 = scmp.eq.s32.totalorder %s21, 1
      %p65 = por %p63, %p64
      %p67 = scmp.ne.s32.totalorder %s52, %s66
      %p68 = scmp.eq.s32.totalorder %s21, 0
      %p69 = por %p67, %p68
      %s71 = sadd.s32 %s70, 1
      %p74 = scmp.eq.s32.totalorder %s15, 1
      %p75 = scmp.ne.s32.totalorder %s70, %s72
      %p76 = scmp.eq.s32.totalorder %s15, 0
      %p77 = por %p75, %p76
      %p78 = scmp.ne.s32.totalorder %s70, %s72
      %p79 = scmp.eq.s32.totalorder %s20, 1
      %p80 = por %p78, %p79
      %p81 = scmp.ne.s32.totalorder %s72, %s73
      %p82 = scmp.eq.s32.totalorder %s20, 0
      %p83 = por %p81, %p82
      %p84 = scmp.ne.s32.totalorder %s72, %s73
      %p85 = scmp.eq.s32.totalorder %s21, 1
      %p86 = por %p84, %p85
      %p88 = scmp.ne.s32.totalorder %s73, %s87
      %p89 = scmp.eq.s32.totalorder %s21, 0
      %p90 = por %p88, %p89
      %s92 = sadd.s32 %s91, 1
      %p95 = scmp.eq.s32.totalorder %s15, 1
      %p96 = scmp.ne.s32.totalorder %s91, %s93
      %p97 = scmp.eq.s32.totalorder %s15, 0
      %p98 = por %p96, %p97
      %p99 = scmp.ne.s32.totalorder %s91, %s93
      %p100 = scmp.eq.s32.totalorder %s20, 1
      %p101 = por %p99, %p100
      %p102 = scmp.ne.s32.totalorder %s93, %s94
      %p103 = scmp.eq.s32.totalorder %s20, 0
      %p104 = por %p102, %p103
      %p105 = scmp.ne.s32.totalorder %s93, %s94
      %p106 = scmp.eq.s32.totalorder %s21, 1
      %p107 = por %p105, %p106
      %p109 = scmp.ne.s32.totalorder %s94, %s108
      %p110 = scmp.eq.s32.totalorder %s21, 0
      %p111 = por %p109, %p110
      %s113 = sadd.s32 %s112, 1
      %p116 = scmp.eq.s32.totalorder %s15, 1
      %p117 = scmp.ne.s32.totalorder %s112, %s114
      %p118 = scmp.eq.s32.totalorder %s15, 0
      %p119 = por %p117, %p118
      %p120 = scmp.ne.s32.totalorder %s112, %s114
      %p121 = scmp.eq.s32.totalorder %s20, 1
      %p122 = por %p120, %p121
      %p123 = scmp.ne.s32.totalorder %s114, %s115
      %p124 = scmp.eq.s32.totalorder %s20, 0
      %p125 = por %p123, %p124
      %p126 = scmp.ne.s32.totalorder %s114, %s115
      %p127 = scmp.eq.s32.totalorder %s21, 1
      %p128 = por %p126, %p127
      %p130 = scmp.ne.s32.totalorder %s115, %s129
      %p131 = scmp.eq.s32.totalorder %s21, 0
      %p132 = por %p130, %p131
      %s133 = ssub.s32 %s15, %s22
      %p134 = scmp.eq.s32.totalorder %s133, 0
      %s136 = sadd.s32 %s135, 1
      %s137 = scalar_select %p134, %s135, %s136
      %p140 = pneg %p134
      %p141 = scmp.eq.s32.totalorder %s15, 1
      %p142 = por %p140, %p141
      %p143 = scmp.ne.s32.totalorder %s135, %s138
      %p144 = scmp.eq.s32.totalorder %s15, 0
      %p145 = por %p143, %p144
      %p146 = scmp.ne.s32.totalorder %s135, %s138
      %p147 = scmp.eq.s32.totalorder %s20, 1
      %p148 = por %p146, %p147
      %p149 = scmp.ne.s32.totalorder %s138, %s139
      %p150 = scmp.eq.s32.totalorder %s20, 0
      %p151 = por %p149, %p150
      %p152 = scmp.ne.s32.totalorder %s138, %s139
      %p153 = scmp.eq.s32.totalorder %s21, 1
      %p154 = por %p152, %p153
      %p156 = scmp.ne.s32.totalorder %s139, %s155
      %p157 = scmp.eq.s32.totalorder %s21, 0
      %p158 = por %p156, %p157
      %p159 = scmp.le.s32.totalorder 1, %s15
      %p160 = scmp.lt.s32.totalorder %s15, 3
      %p161 = pnand %p159, %p160
      %p162 = pneg %p161
      // Predicated region
      $region9: #{neural_net_forward.1} parent=5 // pred_check
        _
      $region10: #{neural_net_forward.1} parent=5 // pred_check_branch
        %164 = sbr.rel (%p161) target = $region12
      $region11: #{neural_net_forward.1} parent=5 // pred_region
        %s165 = ssub.s32 %s15, 1
        // Predicated region
        $region13: #{neural_net_forward.1} parent=11 // pred_check
          %p166 = pneg %p62
        $region14: #{neural_net_forward.1} parent=11 // pred_check_branch
          %168 = sbr.rel (%p166) target = $region16
        $region15: #{neural_net_forward.1} parent=11 // pred_region
          %s170 = ssub.s32 6272, 6272
          %171 = vsyncadd [#allocation5], %s170
          %s172 = sshll.u32 [#allocation4], 4
          %s173 = int_to_ptr.vmem [resolvable:$true] %s172
          %178 = dma.hbm_to_vmem [thread:$0]  %s1, 6272, %s173, [#allocation5], 64, 64, 4
        $region16: #{neural_net_forward.1} parent=11 // pred_fallthru
          _
        // Predicated region
        $region17: #{neural_net_forward.1} parent=11 // pred_check
          %p179 = pneg %p83
        $region18: #{neural_net_forward.1} parent=11 // pred_check_branch
          %181 = sbr.rel (%p179) target = $region20
        $region19: #{neural_net_forward.1} parent=11 // pred_region
          _
        $region20: #{neural_net_forward.1} parent=11 // pred_fallthru
          _
        // Predicated region
        $region21: #{neural_net_forward.1} parent=11 // pred_check
          %p182 = pneg %p104
        $region22: #{neural_net_forward.1} parent=11 // pred_check_branch
          %184 = sbr.rel (%p182) target = $region24
        $region23: #{neural_net_forward.1} parent=11 // pred_region
          _
        $region24: #{neural_net_forward.1} parent=11 // pred_fallthru
          _
        // Predicated region
        $region25: #{neural_net_forward.1} parent=11 // pred_check
          %p185 = pneg %p125
        $region26: #{neural_net_forward.1} parent=11 // pred_check_branch
          %187 = sbr.rel (%p185) target = $region28
        $region27: #{neural_net_forward.1} parent=11 // pred_region
          _
        $region28: #{neural_net_forward.1} parent=11 // pred_fallthru
          _
      $region12: #{neural_net_forward.1} parent=5 // pred_fallthru
        _
      %p188 = scmp.lt.s32.totalorder %s15, 2
      // Predicated region
      $region29: #{neural_net_forward.1} parent=5 // pred_check
        %p189 = pneg %p188
      $region30: #{neural_net_forward.1} parent=5 // pred_check_branch
        %191 = sbr.rel (%p189) target = $region32
      $region31: #{neural_net_forward.1} parent=5 // pred_region
        // Predicated region
        $region33: #{neural_net_forward.1} parent=31 // pred_check
          %p192 = pneg %p35
        $region34: #{neural_net_forward.1} parent=31 // pred_check_branch
          %194 = sbr.rel (%p192) target = $region36
        $region35: #{neural_net_forward.1} parent=31 // pred_region
          %s195 = sand.u32 %s25, 1
          %s196 = scalar_lea.sflag [#allocation3], %s195
          %s197 = sand.u32 %s25, 1
          %s198 = smul.addr %s197, 112
          %s199 = scalar_lea.vmem [#allocation2], %s198
          %s200 = smul.u32 2, %s15
          %s202 = ssub.s32 1792, 1792
          %203 = vsyncadd %s196, %s202
          %s204 = smul.addr %s200, 7
          %s205 = smul.addr %s204, 128
          %s206 = scalar_lea.hbm %s0, %s205
          %s207 = sshll.u32 %s199, 4
          %s208 = int_to_ptr.vmem [resolvable:$true] %s207
          %213 = dma.hbm_to_vmem [thread:$0]  %s206, 1792, %s208, %s196, 896, 896, 56
        $region36: #{neural_net_forward.1} parent=31 // pred_fallthru
          _
      $region32: #{neural_net_forward.1} parent=5 // pred_fallthru
        _
      %p214 = scmp.le.s32.totalorder 1, %s15
      %p215 = scmp.lt.s32.totalorder %s15, 3
      %p216 = pnand %p214, %p215
      %p217 = pneg %p216
      // Predicated region
      $region37: #{neural_net_forward.1} parent=5 // pred_check
        _
      $region38: #{neural_net_forward.1} parent=5 // pred_check_branch
        %219 = sbr.rel (%p216) target = $region40
      $region39: #{neural_net_forward.1} parent=5 // pred_region
        %s220 = ssub.s32 %s15, 1
        %s221 = sand.u32 %s28, 1
        %s222 = scalar_lea.sflag [#allocation3], %s221
        %s223 = sand.u32 %s28, 1
        %s224 = smul.addr %s223, 112
        %s225 = scalar_lea.vmem [#allocation2], %s224
        // Predicated region
        $region41: #{neural_net_forward.1} parent=39 // pred_check
          %p226 = pneg %p41
        $region42: #{neural_net_forward.1} parent=39 // pred_check_branch
          %228 = sbr.rel (%p226) target = $region44
        $region43: #{neural_net_forward.1} parent=39 // pred_region
          %229 = dma.done %s222, 1792
        $region44: #{neural_net_forward.1} parent=39 // pred_fallthru
          _
        // Predicated region
        $region45: #{neural_net_forward.1} parent=39 // pred_check
          %p230 = pneg %p62
        $region46: #{neural_net_forward.1} parent=39 // pred_check_branch
          %232 = sbr.rel (%p230) target = $region48
        $region47: #{neural_net_forward.1} parent=39 // pred_region
          %233 = dma.done [#allocation5], 6272
        $region48: #{neural_net_forward.1} parent=39 // pred_fallthru
          _
        %s234 = sand.u32 %s28, 1
        %s235 = scalar_lea.sflag [#allocation3], %s234
        %s236 = sand.u32 %s28, 1
        %s237 = smul.addr %s236, 112
        %s238 = scalar_lea.vmem [#allocation2], %s237
        %p239 = pneg %p41
        %p240 = pneg %p38
        %p241 = pneg %p62
        %p242 = pneg %p59
        %p243 = pneg %p83
        %p244 = pneg %p80
        %p245 = pneg %p104
        %p246 = pneg %p101
        %p247 = pneg %p125
        %p248 = pneg %p122
        %p249 = pneg %p151
        %p250 = pneg %p148
        %s251 = smul.u32 2, %s20
        %p252 = scmp.lt.s32.totalorder %s251, 3
        %s253 = scalar_select %p252, %s251, 3
        %s254 = smul.addr %s253, 8
        %s255 = scalar_lea.vmem %s5, %s254
        %s256 = smul.u32 2, %s20
        %s257 = smul.u32 2, %s20
        %p258 = scmp.lt.s32.totalorder %s257, 3
        %s259 = scalar_select %p258, %s257, 3
        %s260 = smul.addr %s259, 8
        %s261 = scalar_lea.vmem %s5, %s260
        %s262 = smul.u32 2, %s20
        %v264 = vld [vmem:[%s225] sm:$0xff]
        %v265 = vld [vmem:[%s225 + $0x8] sm:$0xff]
        %v266 = vld [vmem:[%s225 + $0x10] sm:$0xff]
        %v267 = vld [vmem:[%s225 + $0x18] sm:$0xff]
        %v268 = vld [vmem:[%s225 + $0x20] sm:$0xff]
        %v269 = vld [vmem:[%s225 + $0x28] sm:$0xff]
        %v270 = vld [vmem:[%s225 + $0x30] sm:$0xff]
        %v271 = vld [vmem:[%s225 + $0x38] sm:$0xff]
        %v272 = vld [vmem:[%s225 + $0x40] sm:$0xff]
        %v273 = vld [vmem:[%s225 + $0x48] sm:$0xff]
        %v274 = vld [vmem:[%s225 + $0x50] sm:$0xff]
        %v275 = vld [vmem:[%s225 + $0x58] sm:$0xff]
        %v276 = vld [vmem:[%s225 + $0x60] sm:$0xff]
        %v277 = vld [vmem:[%s225 + $0x68] sm:$0xff]
        %v278 = vpack.c.bf16 %v271, %v264
        %v279 = vpack.c.bf16 %v272, %v265
        %v280 = vpack.c.bf16 %v273, %v266
        %v281 = vpack.c.bf16 %v274, %v267
        %v282 = vpack.c.bf16 %v275, %v268
        %v283 = vpack.c.bf16 %v276, %v269
        %v284 = vpack.c.bf16 %v277, %v270
        %v285 = vld [vmem:[#allocation4] sm:$0xf]
        %v286 = vld [vmem:[#allocation4 + $0x4] sm:$0xf]
        %v287 = vld [vmem:[#allocation4 + $0x8] sm:$0xf]
        %v288 = vld [vmem:[#allocation4 + $0xc] sm:$0xf]
        %v289 = vld [vmem:[#allocation4 + $0x10] sm:$0xf]
        %v290 = vld [vmem:[#allocation4 + $0x14] sm:$0xf]
        %v291 = vld [vmem:[#allocation4 + $0x18] sm:$0xf]
        %v292 = vld [vmem:[#allocation4 + $0x1c] sm:$0xf]
        %v293 = vld [vmem:[#allocation4 + $0x20] sm:$0xf]
        %v294 = vld [vmem:[#allocation4 + $0x24] sm:$0xf]
        %v295 = vld [vmem:[#allocation4 + $0x28] sm:$0xf]
        %v296 = vld [vmem:[#allocation4 + $0x2c] sm:$0xf]
        %v297 = vld [vmem:[#allocation4 + $0x30] sm:$0xf]
        %v298 = vld [vmem:[#allocation4 + $0x34] sm:$0xf]
        %v299 = vld [vmem:[#allocation4 + $0x38] sm:$0xf]
        %v300 = vld [vmem:[#allocation4 + $0x3c] sm:$0xf]
        %v301 = vld [vmem:[#allocation4 + $0x40] sm:$0xf]
        %v302 = vld [vmem:[#allocation4 + $0x44] sm:$0xf]
        %v303 = vld [vmem:[#allocation4 + $0x48] sm:$0xf]
        %v304 = vld [vmem:[#allocation4 + $0x4c] sm:$0xf]
        %v305 = vld [vmem:[#allocation4 + $0x50] sm:$0xf]
        %v306 = vld [vmem:[#allocation4 + $0x54] sm:$0xf]
        %v307 = vld [vmem:[#allocation4 + $0x58] sm:$0xf]
        %v308 = vld [vmem:[#allocation4 + $0x5c] sm:$0xf]
        %v309 = vld [vmem:[#allocation4 + $0x60] sm:$0xf]
        %v310 = vld [vmem:[#allocation4 + $0x64] sm:$0xf]
        %v311 = vld [vmem:[#allocation4 + $0x68] sm:$0xf]
        %v312 = vld [vmem:[#allocation4 + $0x6c] sm:$0xf]
        %v313 = vld [vmem:[#allocation4 + $0x70] sm:$0xf]
        %v314 = vld [vmem:[#allocation4 + $0x74] sm:$0xf]
        %v315 = vld [vmem:[#allocation4 + $0x78] sm:$0xf]
        %v316 = vld [vmem:[#allocation4 + $0x7c] sm:$0xf]
        %v317 = vld [vmem:[#allocation4 + $0x80] sm:$0xf]
        %v318 = vld [vmem:[#allocation4 + $0x84] sm:$0xf]
        %v319 = vld [vmem:[#allocation4 + $0x88] sm:$0xf]
        %v320 = vld [vmem:[#allocation4 + $0x8c] sm:$0xf]
        %v321 = vld [vmem:[#allocation4 + $0x90] sm:$0xf]
        %v322 = vld [vmem:[#allocation4 + $0x94] sm:$0xf]
        %v323 = vld [vmem:[#allocation4 + $0x98] sm:$0xf]
        %v324 = vld [vmem:[#allocation4 + $0x9c] sm:$0xf]
        %v325 = vld [vmem:[#allocation4 + $0xa0] sm:$0xf]
        %v326 = vld [vmem:[#allocation4 + $0xa4] sm:$0xf]
        %v327 = vld [vmem:[#allocation4 + $0xa8] sm:$0xf]
        %v328 = vld [vmem:[#allocation4 + $0xac] sm:$0xf]
        %v329 = vld [vmem:[#allocation4 + $0xb0] sm:$0xf]
        %v330 = vld [vmem:[#allocation4 + $0xb4] sm:$0xf]
        %v331 = vld [vmem:[#allocation4 + $0xb8] sm:$0xf]
        %v332 = vld [vmem:[#allocation4 + $0xbc] sm:$0xf]
        %v333 = vld [vmem:[#allocation4 + $0xc0] sm:$0xf]
        %v334 = vld [vmem:[#allocation4 + $0xc4] sm:$0xf]
        %v335 = vld [vmem:[#allocation4 + $0xc8] sm:$0xf]
        %v336 = vld [vmem:[#allocation4 + $0xcc] sm:$0xf]
        %v337 = vld [vmem:[#allocation4 + $0xd0] sm:$0xf]
        %v338 = vld [vmem:[#allocation4 + $0xd4] sm:$0xf]
        %v339 = vld [vmem:[#allocation4 + $0xd8] sm:$0xf]
        %v340 = vld [vmem:[#allocation4 + $0xdc] sm:$0xf]
        %v341 = vld [vmem:[#allocation4 + $0xe0] sm:$0xf]
        %v342 = vld [vmem:[#allocation4 + $0xe4] sm:$0xf]
        %v343 = vld [vmem:[#allocation4 + $0xe8] sm:$0xf]
        %v344 = vld [vmem:[#allocation4 + $0xec] sm:$0xf]
        %v345 = vld [vmem:[#allocation4 + $0xf0] sm:$0xf]
        %v346 = vld [vmem:[#allocation4 + $0xf4] sm:$0xf]
        %v347 = vld [vmem:[#allocation4 + $0xf8] sm:$0xf]
        %v348 = vld [vmem:[#allocation4 + $0xfc] sm:$0xf]
        %v349 = vld [vmem:[#allocation4 + $0x100] sm:$0xf]
        %v350 = vld [vmem:[#allocation4 + $0x104] sm:$0xf]
        %v351 = vld [vmem:[#allocation4 + $0x108] sm:$0xf]
        %v352 = vld [vmem:[#allocation4 + $0x10c] sm:$0xf]
        %v353 = vld [vmem:[#allocation4 + $0x110] sm:$0xf]
        %v354 = vld [vmem:[#allocation4 + $0x114] sm:$0xf]
        %v355 = vld [vmem:[#allocation4 + $0x118] sm:$0xf]
        %v356 = vld [vmem:[#allocation4 + $0x11c] sm:$0xf]
        %v357 = vld [vmem:[#allocation4 + $0x120] sm:$0xf]
        %v358 = vld [vmem:[#allocation4 + $0x124] sm:$0xf]
        %v359 = vld [vmem:[#allocation4 + $0x128] sm:$0xf]
        %v360 = vld [vmem:[#allocation4 + $0x12c] sm:$0xf]
        %v361 = vld [vmem:[#allocation4 + $0x130] sm:$0xf]
        %v362 = vld [vmem:[#allocation4 + $0x134] sm:$0xf]
        %v363 = vld [vmem:[#allocation4 + $0x138] sm:$0xf]
        %v364 = vld [vmem:[#allocation4 + $0x13c] sm:$0xf]
        %v365 = vld [vmem:[#allocation4 + $0x140] sm:$0xf]
        %v366 = vld [vmem:[#allocation4 + $0x144] sm:$0xf]
        %v367 = vld [vmem:[#allocation4 + $0x148] sm:$0xf]
        %v368 = vld [vmem:[#allocation4 + $0x14c] sm:$0xf]
        %v369 = vld [vmem:[#allocation4 + $0x150] sm:$0xf]
        %v370 = vld [vmem:[#allocation4 + $0x154] sm:$0xf]
        %v371 = vld [vmem:[#allocation4 + $0x158] sm:$0xf]
        %v372 = vld [vmem:[#allocation4 + $0x15c] sm:$0xf]
        %v373 = vld [vmem:[#allocation4 + $0x160] sm:$0xf]
        %v374 = vld [vmem:[#allocation4 + $0x164] sm:$0xf]
        %v375 = vld [vmem:[#allocation4 + $0x168] sm:$0xf]
        %v376 = vld [vmem:[#allocation4 + $0x16c] sm:$0xf]
        %v377 = vld [vmem:[#allocation4 + $0x170] sm:$0xf]
        %v378 = vld [vmem:[#allocation4 + $0x174] sm:$0xf]
        %v379 = vld [vmem:[#allocation4 + $0x178] sm:$0xf]
        %v380 = vld [vmem:[#allocation4 + $0x17c] sm:$0xf]
        %v381 = vld [vmem:[#allocation4 + $0x180] sm:$0xf]
        %v382 = vld [vmem:[#allocation4 + $0x184] sm:$0xf]
        %v383 = vld [vmem:[%s2] sm:$0x1]
        %v385 = vlaneseq
        %v386 = vshrl.u32 %v385, 7
        %v387 = vsub.s32 0, %v386
        %v388 = vrot.slane %v383, %v387
        %v488 = vunpack.c.l.b16 %v285
        %v489 = vunpack.c.l.b16 %v286
        %v490 = vunpack.c.l.b16 %v287
        %v491 = vunpack.c.l.b16 %v288
        %v492 = vunpack.c.l.b16 %v289
        %v493 = vunpack.c.l.b16 %v290
        %v494 = vunpack.c.l.b16 %v291
        %v495 = vunpack.c.l.b16 %v292
        %v496 = vunpack.c.l.b16 %v293
        %v497 = vunpack.c.l.b16 %v294
        %v498 = vunpack.c.l.b16 %v295
        %v499 = vunpack.c.l.b16 %v296
        %v500 = vunpack.c.l.b16 %v297
        %v501 = vunpack.c.l.b16 %v298
        %v502 = vunpack.c.l.b16 %v299
        %v503 = vunpack.c.l.b16 %v300
        %v504 = vunpack.c.l.b16 %v301
        %v505 = vunpack.c.l.b16 %v302
        %v506 = vunpack.c.l.b16 %v303
        %v507 = vunpack.c.l.b16 %v304
        %v508 = vunpack.c.l.b16 %v305
        %v509 = vunpack.c.l.b16 %v306
        %v510 = vunpack.c.l.b16 %v307
        %v511 = vunpack.c.l.b16 %v308
        %v512 = vunpack.c.l.b16 %v309
        %v513 = vunpack.c.l.b16 %v310
        %v514 = vunpack.c.l.b16 %v311
        %v515 = vunpack.c.l.b16 %v312
        %v516 = vunpack.c.l.b16 %v313
        %v517 = vunpack.c.l.b16 %v314
        %v518 = vunpack.c.l.b16 %v315
        %v519 = vunpack.c.l.b16 %v316
        %v520 = vunpack.c.l.b16 %v317
        %v521 = vunpack.c.l.b16 %v318
        %v522 = vunpack.c.l.b16 %v319
        %v523 = vunpack.c.l.b16 %v320
        %v524 = vunpack.c.l.b16 %v321
        %v525 = vunpack.c.l.b16 %v322
        %v526 = vunpack.c.l.b16 %v323
        %v527 = vunpack.c.l.b16 %v324
        %v528 = vunpack.c.l.b16 %v325
        %v529 = vunpack.c.l.b16 %v326
        %v530 = vunpack.c.l.b16 %v327
        %v531 = vunpack.c.l.b16 %v328
        %v532 = vunpack.c.l.b16 %v329
        %v533 = vunpack.c.l.b16 %v330
        %v534 = vunpack.c.l.b16 %v331
        %v535 = vunpack.c.l.b16 %v332
        %v536 = vunpack.c.l.b16 %v333
        %v537 = vunpack.c.l.b16 %v334
        %v538 = vunpack.c.l.b16 %v335
        %v539 = vunpack.c.l.b16 %v336
        %v540 = vunpack.c.l.b16 %v337
        %v541 = vunpack.c.l.b16 %v338
        %v542 = vunpack.c.l.b16 %v339
        %v543 = vunpack.c.l.b16 %v340
        %v544 = vunpack.c.l.b16 %v341
        %v545 = vunpack.c.l.b16 %v342
        %v546 = vunpack.c.l.b16 %v343
        %v547 = vunpack.c.l.b16 %v344
        %v548 = vunpack.c.l.b16 %v345
        %v549 = vunpack.c.l.b16 %v346
        %v550 = vunpack.c.l.b16 %v347
        %v551 = vunpack.c.l.b16 %v348
        %v552 = vunpack.c.l.b16 %v349
        %v553 = vunpack.c.l.b16 %v350
        %v554 = vunpack.c.l.b16 %v351
        %v555 = vunpack.c.l.b16 %v352
        %v556 = vunpack.c.l.b16 %v353
        %v557 = vunpack.c.l.b16 %v354
        %v558 = vunpack.c.l.b16 %v355
        %v559 = vunpack.c.l.b16 %v356
        %v560 = vunpack.c.l.b16 %v357
        %v561 = vunpack.c.l.b16 %v358
        %v562 = vunpack.c.l.b16 %v359
        %v563 = vunpack.c.l.b16 %v360
        %v564 = vunpack.c.l.b16 %v361
        %v565 = vunpack.c.l.b16 %v362
        %v566 = vunpack.c.l.b16 %v363
        %v567 = vunpack.c.l.b16 %v364
        %v568 = vunpack.c.l.b16 %v365
        %v569 = vunpack.c.l.b16 %v366
        %v570 = vunpack.c.l.b16 %v367
        %v571 = vunpack.c.l.b16 %v368
        %v572 = vunpack.c.l.b16 %v369
        %v573 = vunpack.c.l.b16 %v370
        %v574 = vunpack.c.l.b16 %v371
        %v575 = vunpack.c.l.b16 %v372
        %v576 = vunpack.c.l.b16 %v373
        %v577 = vunpack.c.l.b16 %v374
        %v578 = vunpack.c.l.b16 %v375
        %v579 = vunpack.c.l.b16 %v376
        %v580 = vunpack.c.l.b16 %v377
        %v581 = vunpack.c.l.b16 %v378
        %v582 = vunpack.c.l.b16 %v379
        %v583 = vunpack.c.l.b16 %v380
        %v584 = vunpack.c.l.b16 %v381
        %v585 = vunpack.c.l.b16 %v382
        %v586 = vpack.c.b16 %v489, %v488
        %v587 = vpack.c.b16 %v491, %v490
        %v588 = vpack.c.b16 %v493, %v492
        %v589 = vpack.c.b16 %v495, %v494
        %v590 = vpack.c.b16 %v497, %v496
        %v591 = vpack.c.b16 %v499, %v498
        %v592 = vpack.c.b16 %v501, %v500
        %v593 = vpack.c.b16 %v503, %v502
        %v594 = vpack.c.b16 %v505, %v504
        %v595 = vpack.c.b16 %v507, %v506
        %v596 = vpack.c.b16 %v509, %v508
        %v597 = vpack.c.b16 %v511, %v510
        %v598 = vpack.c.b16 %v513, %v512
        %v599 = vpack.c.b16 %v515, %v514
        %v600 = vpack.c.b16 %v517, %v516
        %v601 = vpack.c.b16 %v519, %v518
        %v602 = vpack.c.b16 %v521, %v520
        %v603 = vpack.c.b16 %v523, %v522
        %v604 = vpack.c.b16 %v525, %v524
        %v605 = vpack.c.b16 %v527, %v526
        %v606 = vpack.c.b16 %v529, %v528
        %v607 = vpack.c.b16 %v531, %v530
        %v608 = vpack.c.b16 %v533, %v532
        %v609 = vpack.c.b16 %v535, %v534
        %v610 = vpack.c.b16 %v537, %v536
        %v611 = vpack.c.b16 %v539, %v538
        %v612 = vpack.c.b16 %v541, %v540
        %v613 = vpack.c.b16 %v543, %v542
        %v614 = vpack.c.b16 %v545, %v544
        %v615 = vpack.c.b16 %v547, %v546
        %v616 = vpack.c.b16 %v549, %v548
        %v617 = vpack.c.b16 %v551, %v550
        %v618 = vpack.c.b16 %v553, %v552
        %v619 = vpack.c.b16 %v555, %v554
        %v620 = vpack.c.b16 %v557, %v556
        %v621 = vpack.c.b16 %v559, %v558
        %v622 = vpack.c.b16 %v561, %v560
        %v623 = vpack.c.b16 %v563, %v562
        %v624 = vpack.c.b16 %v565, %v564
        %v625 = vpack.c.b16 %v567, %v566
        %v626 = vpack.c.b16 %v569, %v568
        %v627 = vpack.c.b16 %v571, %v570
        %v628 = vpack.c.b16 %v573, %v572
        %v629 = vpack.c.b16 %v575, %v574
        %v630 = vpack.c.b16 %v577, %v576
        %v631 = vpack.c.b16 %v579, %v578
        %v632 = vpack.c.b16 %v581, %v580
        %v633 = vpack.c.b16 %v583, %v582
        %v634 = vpack.c.b16 %v585, %v584
        %vm684 = vcmask 130048
        %v686 = vsel %vm684, %v284, 0
        %688 = vmatprep.subr.bf16.mxu0 0
        %689 = vmatpush1.bf16.msra.mxu0 %v586
        %690 = vmatprep.subr.bf16.mxu0 0
        %691 = vmatpush1.bf16.msra.mxu0 %v587
        %692 = vmatprep.subr.bf16.mxu0 0
        %693 = vmatpush1.bf16.msra.mxu0 %v588
        %694 = vmatprep.subr.bf16.mxu0 0
        %695 = vmatpush1.bf16.msra.mxu0 %v589
        %696 = vmatprep.subr.bf16.mxu0 0
        %697 = vmatpush1.bf16.msra.mxu0 %v590
        %698 = vmatprep.subr.bf16.mxu0 0
        %699 = vmatpush1.bf16.msra.mxu0 %v591
        %700 = vmatprep.subr.bf16.mxu0 0
        %701 = vmatpush1.bf16.msra.mxu0 %v592
        %702 = vmatprep.subr.bf16.mxu0 0
        %703 = vmatpush1.bf16.msra.mxu0 %v593
        %704 = vmatprep.subr.bf16.mxu0 0
        %705 = vmatpush1.bf16.msra.mxu0 %v594
        %706 = vmatprep.subr.bf16.mxu0 0
        %707 = vmatpush1.bf16.msra.mxu0 %v595
        %708 = vmatprep.subr.bf16.mxu0 0
        %709 = vmatpush1.bf16.msra.mxu0 %v596
        %710 = vmatprep.subr.bf16.mxu0 0
        %711 = vmatpush1.bf16.msra.mxu0 %v597
        %712 = vmatprep.subr.bf16.mxu0 0
        %713 = vmatpush1.bf16.msra.mxu0 %v598
        %714 = vmatprep.subr.bf16.mxu0 0
        %715 = vmatpush1.bf16.msra.mxu0 %v599
        %716 = vmatprep.subr.bf16.mxu0 0
        %717 = vmatpush1.bf16.msra.mxu0 %v600
        %718 = vmatprep.subr.bf16.mxu0 0
        %719 = vmatpush1.bf16.msra.mxu0 %v601
        %720 = vmatprep.mubr.bf16.mxu0 %v279
        %721 = vmatmul.mubr.bf16.gmra.mrb[0].mxu0 %v278
        %v722 = vpop.f32.mrb[0].mxu0
        %v723 = vadd.f32 %v388, %v722
        %v724 = vpop.f32.mrb[0].mxu0
        %v725 = vpop.f32.mrb[0].mxu0
        %v726 = vadd.f32 %v388, %v725
        %v727 = vpop.f32.mrb[0].mxu0
        %728 = vdwg.mxu0
        %729 = vmatprep.subr.bf16.mxu0 0
        %730 = vmatpush1.bf16.msra.mxu0 %v602
        %731 = vmatprep.subr.bf16.mxu0 0
        %732 = vmatpush1.bf16.msra.mxu0 %v603
        %733 = vmatprep.subr.bf16.mxu0 0
        %734 = vmatpush1.bf16.msra.mxu0 %v604
        %735 = vmatprep.subr.bf16.mxu0 0
        %736 = vmatpush1.bf16.msra.mxu0 %v605
        %737 = vmatprep.subr.bf16.mxu0 0
        %738 = vmatpush1.bf16.msra.mxu0 %v606
        %739 = vmatprep.subr.bf16.mxu0 0
        %740 = vmatpush1.bf16.msra.mxu0 %v607
        %741 = vmatprep.subr.bf16.mxu0 0
        %742 = vmatpush1.bf16.msra.mxu0 %v608
        %743 = vmatprep.subr.bf16.mxu0 0
        %744 = vmatpush1.bf16.msra.mxu0 %v609
        %745 = vmatprep.subr.bf16.mxu0 0
        %746 = vmatpush1.bf16.msra.mxu0 %v610
        %747 = vmatprep.subr.bf16.mxu0 0
        %748 = vmatpush1.bf16.msra.mxu0 %v611
        %749 = vmatprep.subr.bf16.mxu0 0
        %750 = vmatpush1.bf16.msra.mxu0 %v612
        %751 = vmatprep.subr.bf16.mxu0 0
        %752 = vmatpush1.bf16.msra.mxu0 %v613
        %753 = vmatprep.subr.bf16.mxu0 0
        %754 = vmatpush1.bf16.msra.mxu0 %v614
        %755 = vmatprep.subr.bf16.mxu0 0
        %756 = vmatpush1.bf16.msra.mxu0 %v615
        %757 = vmatprep.subr.bf16.mxu0 0
        %758 = vmatpush1.bf16.msra.mxu0 %v616
        %759 = vmatprep.subr.bf16.mxu0 0
        %760 = vmatpush1.bf16.msra.mxu0 %v617
        %761 = vmatprep.mubr.bf16.mxu0 %v281
        %762 = vmatmul.mubr.bf16.gmra.mrb[0].mxu0 %v280
        %v763 = vpop.f32.mrb[0].mxu0
        %v764 = vadd.f32 %v723, %v763
        %v765 = vpop.f32.mrb[0].mxu0
        %v766 = vpop.f32.mrb[0].mxu0
        %v767 = vadd.f32 %v726, %v766
        %v768 = vpop.f32.mrb[0].mxu0
        %769 = vdwg.mxu0
        %770 = vmatprep.subr.bf16.mxu0 0
        %771 = vmatpush1.bf16.msra.mxu0 %v618
        %772 = vmatprep.subr.bf16.mxu0 0
        %773 = vmatpush1.bf16.msra.mxu0 %v619
        %774 = vmatprep.subr.bf16.mxu0 0
        %775 = vmatpush1.bf16.msra.mxu0 %v620
        %776 = vmatprep.subr.bf16.mxu0 0
        %777 = vmatpush1.bf16.msra.mxu0 %v621
        %778 = vmatprep.subr.bf16.mxu0 0
        %779 = vmatpush1.bf16.msra.mxu0 %v622
        %780 = vmatprep.subr.bf16.mxu0 0
        %781 = vmatpush1.bf16.msra.mxu0 %v623
        %782 = vmatprep.subr.bf16.mxu0 0
        %783 = vmatpush1.bf16.msra.mxu0 %v624
        %784 = vmatprep.subr.bf16.mxu0 0
        %785 = vmatpush1.bf16.msra.mxu0 %v625
        %786 = vmatprep.subr.bf16.mxu0 0
        %787 = vmatpush1.bf16.msra.mxu0 %v626
        %788 = vmatprep.subr.bf16.mxu0 0
        %789 = vmatpush1.bf16.msra.mxu0 %v627
        %790 = vmatprep.subr.bf16.mxu0 0
        %791 = vmatpush1.bf16.msra.mxu0 %v628
        %792 = vmatprep.subr.bf16.mxu0 0
        %793 = vmatpush1.bf16.msra.mxu0 %v629
        %794 = vmatprep.subr.bf16.mxu0 0
        %795 = vmatpush1.bf16.msra.mxu0 %v630
        %796 = vmatprep.subr.bf16.mxu0 0
        %797 = vmatpush1.bf16.msra.mxu0 %v631
        %798 = vmatprep.subr.bf16.mxu0 0
        %799 = vmatpush1.bf16.msra.mxu0 %v632
        %800 = vmatprep.subr.bf16.mxu0 0
        %801 = vmatpush1.bf16.msra.mxu0 %v633
        %802 = vmatprep.mubr.bf16.mxu0 %v283
        %803 = vmatmul.mubr.bf16.gmra.mrb[0].mxu0 %v282
        %v804 = vpop.f32.mrb[0].mxu0
        %v805 = vadd.f32 %v764, %v804
        %v806 = vpop.f32.mrb[0].mxu0
        %v807 = vpop.f32.mrb[0].mxu0
        %v808 = vadd.f32 %v767, %v807
        %v809 = vpop.f32.mrb[0].mxu0
        %810 = vdwg.mxu0
        %811 = vmatprep.subr.bf16.mxu0 0
        %812 = vmatpush1.bf16.msra.mxu0 %v634
        %813 = vmatprep.subr.bf16.mxu0 0
        %814 = vmatpush1.bf16.msra.mxu0 0
        %815 = vmatprep.subr.bf16.mxu0 0
        %816 = vmatpush1.bf16.msra.mxu0 0
        %817 = vmatprep.subr.bf16.mxu0 0
        %818 = vmatpush1.bf16.msra.mxu0 0
        %819 = vmatprep.subr.bf16.mxu0 0
        %820 = vmatpush1.bf16.msra.mxu0 0
        %821 = vmatprep.subr.bf16.mxu0 0
        %822 = vmatpush1.bf16.msra.mxu0 0
        %823 = vmatprep.subr.bf16.mxu0 0
        %824 = vmatpush1.bf16.msra.mxu0 0
        %825 = vmatprep.subr.bf16.mxu0 0
        %826 = vmatpush1.bf16.msra.mxu0 0
        %827 = vmatprep.subr.bf16.mxu0 0
        %828 = vmatpush1.bf16.msra.mxu0 0
        %829 = vmatprep.subr.bf16.mxu0 0
        %830 = vmatpush1.bf16.msra.mxu0 0
        %831 = vmatprep.subr.bf16.mxu0 0
        %832 = vmatpush1.bf16.msra.mxu0 0
        %833 = vmatprep.subr.bf16.mxu0 0
        %834 = vmatpush1.bf16.msra.mxu0 0
        %835 = vmatprep.subr.bf16.mxu0 0
        %836 = vmatpush1.bf16.msra.mxu0 0
        %837 = vmatprep.subr.bf16.mxu0 0
        %838 = vmatpush1.bf16.msra.mxu0 0
        %839 = vmatprep.subr.bf16.mxu0 0
        %840 = vmatpush1.bf16.msra.mxu0 0
        %841 = vmatprep.subr.bf16.mxu0 0
        %842 = vmatpush1.bf16.msra.mxu0 0
        %843 = vmatprep.mubr.bf16.mxu0 0
        %844 = vmatmul.mubr.bf16.gmra.mrb[0].mxu0 %v686
        %v845 = vpop.f32.mrb[0].mxu0
        %v846 = vadd.f32 %v805, %v845
        %v847 = vpop.f32.mrb[0].mxu0
        %v848 = vpop.f32.mrb[0].mxu0
        %v849 = vadd.f32 %v808, %v848
        %v850 = vpop.f32.mrb[0].mxu0
        %851 = vdwg.mxu0
        %v852 = vmax.f32 %v846, 0.0
        %v853 = vmax.f32 %v849, 0.0
        %v854 = vpack.c.bf16 %v853, %v852
        %v855 = vld [vmem:[%s3] sm:$0xf]
        %v856 = vld [vmem:[%s3 + $0x4] sm:$0xf]
        %v857 = vld [vmem:[%s3 + $0x8] sm:$0xf]
        %v858 = vld [vmem:[%s3 + $0xc] sm:$0xf]
        %v859 = vld [vmem:[%s3 + $0x10] sm:$0xf]
        %v860 = vld [vmem:[%s3 + $0x14] sm:$0xf]
        %v861 = vld [vmem:[%s3 + $0x18] sm:$0xf]
        %v862 = vld [vmem:[%s3 + $0x1c] sm:$0xf]
        %v863 = vld [vmem:[%s3 + $0x20] sm:$0xf]
        %v864 = vld [vmem:[%s3 + $0x24] sm:$0xf]
        %v865 = vld [vmem:[%s3 + $0x28] sm:$0xf]
        %v866 = vld [vmem:[%s3 + $0x2c] sm:$0xf]
        %v867 = vld [vmem:[%s3 + $0x30] sm:$0xf]
        %v868 = vld [vmem:[%s3 + $0x34] sm:$0xf]
        %v869 = vld [vmem:[%s3 + $0x38] sm:$0xf]
        %v870 = vld [vmem:[%s3 + $0x3c] sm:$0xf]
        %v871 = vld [vmem:[%s4] sm:$0x1]
        %v873 = vlaneseq
        %v874 = vshrl.u32 %v873, 7
        %v875 = vsub.s32 0, %v874
        %v876 = vrot.slane %v871, %v875
        %v894 = vunpack.c.l.b16 %v855
        %v895 = vunpack.c.l.b16 %v856
        %v896 = vunpack.c.l.b16 %v857
        %v897 = vunpack.c.l.b16 %v858
        %v898 = vunpack.c.l.b16 %v859
        %v899 = vunpack.c.l.b16 %v860
        %v900 = vunpack.c.l.b16 %v861
        %v901 = vunpack.c.l.b16 %v862
        %v902 = vunpack.c.l.b16 %v863
        %v903 = vunpack.c.l.b16 %v864
        %v904 = vunpack.c.l.b16 %v865
        %v905 = vunpack.c.l.b16 %v866
        %v906 = vunpack.c.l.b16 %v867
        %v907 = vunpack.c.l.b16 %v868
        %v908 = vunpack.c.l.b16 %v869
        %v909 = vunpack.c.l.b16 %v870
        %v910 = vpack.c.b16 %v895, %v894
        %v911 = vpack.c.b16 %v897, %v896
        %v912 = vpack.c.b16 %v899, %v898
        %v913 = vpack.c.b16 %v901, %v900
        %v914 = vpack.c.b16 %v903, %v902
        %v915 = vpack.c.b16 %v905, %v904
        %v916 = vpack.c.b16 %v907, %v906
        %v917 = vpack.c.b16 %v909, %v908
        %926 = vmatprep.subr.bf16.mxu0 0
        %927 = vmatpush1.bf16.msra.mxu0 %v910
        %928 = vmatprep.subr.bf16.mxu0 0
        %929 = vmatpush1.bf16.msra.mxu0 %v911
        %930 = vmatprep.subr.bf16.mxu0 0
        %931 = vmatpush1.bf16.msra.mxu0 %v912
        %932 = vmatprep.subr.bf16.mxu0 0
        %933 = vmatpush1.bf16.msra.mxu0 %v913
        %934 = vmatprep.subr.bf16.mxu0 0
        %935 = vmatpush1.bf16.msra.mxu0 %v914
        %936 = vmatprep.subr.bf16.mxu0 0
        %937 = vmatpush1.bf16.msra.mxu0 %v915
        %938 = vmatprep.subr.bf16.mxu0 0
        %939 = vmatpush1.bf16.msra.mxu0 %v916
        %940 = vmatprep.subr.bf16.mxu0 0
        %941 = vmatpush1.bf16.msra.mxu0 %v917
        %942 = vmatprep.subr.bf16.mxu0 0
        %943 = vmatpush1.bf16.msra.mxu0 0
        %944 = vmatprep.subr.bf16.mxu0 0
        %945 = vmatpush1.bf16.msra.mxu0 0
        %946 = vmatprep.subr.bf16.mxu0 0
        %947 = vmatpush1.bf16.msra.mxu0 0
        %948 = vmatprep.subr.bf16.mxu0 0
        %949 = vmatpush1.bf16.msra.mxu0 0
        %950 = vmatprep.subr.bf16.mxu0 0
        %951 = vmatpush1.bf16.msra.mxu0 0
        %952 = vmatprep.subr.bf16.mxu0 0
        %953 = vmatpush1.bf16.msra.mxu0 0
        %954 = vmatprep.subr.bf16.mxu0 0
        %955 = vmatpush1.bf16.msra.mxu0 0
        %956 = vmatprep.subr.bf16.mxu0 0
        %957 = vmatpush1.bf16.msra.mxu0 0
        %958 = vmatprep.mubr.bf16.mxu0 0
        %959 = vmatmul.mubr.bf16.gmra.mrb[0].mxu0 %v854
        %v960 = vpop.f32.mrb[0].mxu0
        %v961 = vadd.f32 %v876, %v960
        %v962 = vpop.f32.mrb[0].mxu0
        %v963 = vpop.f32.mrb[0].mxu0
        %v964 = vadd.f32 %v876, %v963
        %v965 = vpop.f32.mrb[0].mxu0
        %966 = vdwg.mxu0
        %vm967 = vcmask 80896
        %968 = vst.msk [vmem:[%s261] sm:$0xff] %vm967, %v961
        %969 = vst.msk [vmem:[%s261 + $0x8] sm:$0xff] %vm967, %v964
        %s970 = smul.u32 2, %s20
        %p971 = scmp.lt.s32.totalorder %s970, 3
        %s972 = scalar_select %p971, %s970, 3
        %s973 = smul.addr %s972, 8
        %s974 = scalar_lea.vmem %s5, %s973
        // Predicated region
        $region49: #{neural_net_forward.1} parent=39 // pred_check
          %p975 = pneg %p148
        $region50: #{neural_net_forward.1} parent=39 // pred_check_branch
          %977 = sbr.rel (%p975) target = $region52
        $region51: #{neural_net_forward.1} parent=39 // pred_region
          %s978 = smul.u32 2, %s20
        $region52: #{neural_net_forward.1} parent=39 // pred_fallthru
          _
      $region40: #{neural_net_forward.1} parent=5 // pred_fallthru
        _
      %p979 = scmp.le.s32.totalorder 2, %s15
      // Predicated region
      $region53: #{neural_net_forward.1} parent=5 // pred_check
        %p980 = pneg %p979
      $region54: #{neural_net_forward.1} parent=5 // pred_check_branch
        %982 = sbr.rel (%p980) target = $region56
      $region55: #{neural_net_forward.1} parent=5 // pred_region
        %s983 = ssub.s32 %s15, 2
        // Predicated region
        $region57: #{neural_net_forward.1} parent=55 // pred_check
          %p984 = pneg %p154
        $region58: #{neural_net_forward.1} parent=55 // pred_check_branch
          %986 = sbr.rel (%p984) target = $region60
        $region59: #{neural_net_forward.1} parent=55 // pred_region
          %s987 = smul.u32 2, %s21
          %p988 = scmp.lt.s32.totalorder %s987, 3
          %s989 = scalar_select %p988, %s987, 3
          %s990 = smul.addr %s989, 8
          %s991 = scalar_lea.vmem %s5, %s990
        $region60: #{neural_net_forward.1} parent=55 // pred_fallthru
          _
      $region56: #{neural_net_forward.1} parent=5 // pred_fallthru
        _
    $region6: #{neural_net_forward.1} parent=1 // loop_footer
      %s19 = sadd.s32 1, %s15
    $region7: #{neural_net_forward.1} parent=1 // loop_footer_branch
      %14 = sbr.rel target = $region3
    $region8: #{neural_net_forward.1} parent=1 // loop_exit
      _
    %992 = vsyncpa [#allocation3], 1
    %s993 = scalar_lea.sflag [#allocation3], 1
    %994 = vsyncpa %s993, 1
    %995 = vsyncpa [#allocation5], 1

</llo_original>
